<compile_context>
chip_gen: v6e
topology: v6e:2x2x1
jax: 0.10.0
libtpu: 0.0.40
codegen_flags: <defaults>
</compile_context>

<pallas_src>
import jax
import jax.numpy as jnp
from jax import lax
from jax.experimental import pallas as pl
from jax.experimental.pallas import tpu as pltpu


def _mlp_kernel(x_ref, w1_ref, b1_ref, w2_ref, b2_ref, w3_ref, b3_ref, o_ref):
    """Fused 3-layer MLP for one batch tile.

    x_ref  : (tb, in_dim)   input tile (original dtype; cast on the VPU)
    w*_ref : (out, in)      PyTorch nn.Linear layout, compute dtype, VMEM-resident
    b*_ref : (out, 1)       f32 biases, broadcast over the lane (batch) axis
    o_ref  : (out_dim, tb)  f32 output tile, batch on the 128-lane axis (lane-dense stores)
    """
    x = x_ref[...].astype(w1_ref.dtype)  # (tb, in_dim)

    # (out, in) x (tb, in) contracted over `in` -> (out, tb): batch stays on lanes.
    # MXU accumulates in f32; bias add + ReLU run on the VPU against the f32 accumulator.
    h1 = lax.dot_general(w1_ref[...], x, (((1,), (1,)), ((), ())),
                         preferred_element_type=jnp.float32) + b1_ref[...]
    h1 = jnp.maximum(h1, 0.0)

    h2 = jnp.dot(w2_ref[...], h1.astype(w2_ref.dtype),
                 preferred_element_type=jnp.float32) + b2_ref[...]
    h2 = jnp.maximum(h2, 0.0)

    y = jnp.dot(w3_ref[...], h2.astype(w3_ref.dtype),
                preferred_element_type=jnp.float32) + b3_ref[...]
    o_ref[...] = y.astype(o_ref.dtype)


def _round_up(x, m):
    return ((x + m - 1) // m) * m


def custom_policy_forward(x, params, *, tile_b=8192, compute_dtype=jnp.bfloat16,
                          transposed_output=False):
    """x: (B, input_dim). params: PyTorch-layout weights (out, in), biases (out, 1) f32.

    compute_dtype: jnp.bfloat16 (default; bf16 MXU, f32 accumulation) or jnp.float32 (exact).
    Returns (B, out_dim) f32, or (out_dim, B) if transposed_output=True.
    """
    w1, b1, w2, b2, w3, b3 = (params[k] for k in ("w1", "b1", "w2", "b2", "w3", "b3"))
    B, in_dim = x.shape
    out_dim = w3.shape[0]

    # Batch tiling: guarantee >= 2 tiles when B is large enough so both v7x TensorCores
    # get work (the batch grid axis is "parallel"); small batches use one full-extent block.
    if B >= 256:
        tb = max(128, min(tile_b, _round_up(pl.cdiv(B, 2), 128)))
    else:
        tb = B
    num_tiles = pl.cdiv(B, tb)

    # Weights are cast once (tiny, and VMEM-resident across all grid steps).  x is streamed
    # in its original dtype and cast in-kernel: a wrapper-side astype would add a full extra
    # HBM read+write pass over x.
    w1c, w2c, w3c = (w.astype(compute_dtype) for w in (w1, w2, w3))

    const = lambda a: pl.BlockSpec(a.shape, lambda i: (0, 0))  # VMEM-resident, no re-DMA

    itemsize = jnp.dtype(compute_dtype).itemsize
    flops = 2 * B * (in_dim * 64 + 64 * 64 + 64 * out_dim)
    bytes_accessed = (B * in_dim * x.dtype.itemsize           # streamed input
                      + B * out_dim * 4                       # f32 output
                      + (w1c.size + w2c.size + w3c.size) * itemsize
                      + (b1.size + b2.size + b3.size) * 4)

    out = pl.pallas_call(
        _mlp_kernel,
        out_shape=jax.ShapeDtypeStruct((out_dim, B), jnp.float32),
        grid=(num_tiles,),
        in_specs=[
            pl.BlockSpec((tb, in_dim), lambda i: (i, 0)),   # one contiguous slab per DMA
            const(w1c), const(b1),
            const(w2c), const(b2),
            const(w3c), const(b3),
        ],
        out_specs=pl.BlockSpec((out_dim, tb), lambda i: (0, i)),  # lane-dense output stores
        compiler_params=pltpu.CompilerParams(
            dimension_semantics=("parallel",),   # shard batch tiles across v7x's 2 TCs
        ),
        cost_estimate=pl.CostEstimate(flops=flops, transcendentals=0,
                                      bytes_accessed=bytes_accessed),
    )(x, w1c, b1, w2c, b2, w3c, b3)

    if transposed_output:
        return out      # (out_dim, B): zero extra data movement
    return out.T        # (B, out_dim): tiny; normally fuses into the consumer


def init_params(key, input_dim, output_dim, hidden=64):
    """Deterministic synthetic init (uniform +/- 1/sqrt(fan_in), like PyTorch defaults).

    Weights are (out_features, in_features) — identical to nn.Linear.weight.
    Biases are (out_features, 1) f32 for lane-axis broadcasting inside the kernel.
    """
    ks = jax.random.split(key, 6)

    def lin(kw, kb, fan_in, fan_out):
        bound = 1.0 / jnp.sqrt(fan_in)
        w = jax.random.uniform(kw, (fan_out, fan_in), jnp.float32, -bound, bound)
        b = jax.random.uniform(kb, (fan_out, 1), jnp.float32, -bound, bound)
        return w, b

    w1, b1 = lin(ks[0], ks[1], input_dim, hidden)
    w2, b2 = lin(ks[2], ks[3], hidden, hidden)
    w3, b3 = lin(ks[4], ks[5], hidden, output_dim)
    return {"w1": w1, "b1": b1, "w2": w2, "b2": b2, "w3": w3, "b3": b3}


def reference_forward(x, params):
    h = jnp.maximum(x @ params["w1"].T + params["b1"].T, 0.0)
    h = jnp.maximum(h @ params["w2"].T + params["b2"].T, 0.0)
    return h @ params["w3"].T + params["b3"].T


if __name__ == "__main__":
    key = jax.random.PRNGKey(0)
    k_x, k_p, k_x2 = jax.random.split(key, 3)

    input_dim, output_dim = 8, 4
    params = init_params(k_p, input_dim, output_dim)

    # Small batch (single full-extent block), exact f32 compute path.
    x_small = jax.random.normal(k_x, (2, input_dim), jnp.float32)
    out_f32 = jax.block_until_ready(
        custom_policy_forward(x_small, params, compute_dtype=jnp.float32))
    ref_small = reference_forward(x_small, params)
    assert out_f32.shape == (2, output_dim)
    assert jnp.allclose(out_f32, ref_small, atol=1e-4, rtol=1e-4), "f32 small-batch mismatch"

    # Default bf16 compute path (f32 MXU accumulation) — looser tolerance.
    out_bf16 = jax.block_until_ready(custom_policy_forward(x_small, params))
    assert out_bf16.shape == (2, output_dim)
    assert jnp.allclose(out_bf16, ref_small, atol=1e-1, rtol=1e-1), "bf16 small-batch mismatch"

    # Larger batch: tiled "parallel" grid (3 tiles of 128) with a ragged, masked last
    # tile (300 = 2*128 + 44) — no wrapper-side transpose or pad of x.
    x_big = jax.random.normal(k_x2, (300, input_dim), jnp.float32)
    out_big = jax.block_until_ready(
        custom_policy_forward(x_big, params, tile_b=128, compute_dtype=jnp.float32))
    ref_big = reference_forward(x_big, params)
    assert out_big.shape == (300, output_dim)
    assert jnp.allclose(out_big, ref_big, atol=1e-4, rtol=1e-4), "tiled-batch mismatch"

    print("KERNEL_OK")
</pallas_src>

<mosaic_0001>
module attributes {stable_mosaic.version = 11 : i64} {
  func.func @_mlp_kernel(%arg0: i32, %arg1: memref<2x8xf32, #tpu.memory_space<vmem>>, %arg2: memref<64x8xf32, #tpu.memory_space<vmem>>, %arg3: memref<64x1xf32, #tpu.memory_space<vmem>>, %arg4: memref<64x64xf32, #tpu.memory_space<vmem>>, %arg5: memref<64x1xf32, #tpu.memory_space<vmem>>, %arg6: memref<4x64xf32, #tpu.memory_space<vmem>>, %arg7: memref<4x1xf32, #tpu.memory_space<vmem>>, %arg8: memref<4x2xf32, #tpu.memory_space<vmem>>) attributes {dimension_semantics = [#tpu.dimension_semantics<parallel>], iteration_bounds = array<i64: 1>, scalar_prefetch = 0 : i64, scratch_operands = 0 : i64, tpu.core_type = #tpu.core_type<tc>, window_params = [{transform_indices = @transform_0, window_bounds = array<i64: 2, 8>}, {pipeline_mode = #tpu.pipeline_mode<synchronous>, transform_indices = @transform_1, window_bounds = array<i64: 64, 8>}, {pipeline_mode = #tpu.pipeline_mode<synchronous>, transform_indices = @transform_2, window_bounds = array<i64: 64, 1>}, {pipeline_mode = #tpu.pipeline_mode<synchronous>, transform_indices = @transform_3, window_bounds = array<i64: 64, 64>}, {pipeline_mode = #tpu.pipeline_mode<synchronous>, transform_indices = @transform_4, window_bounds = array<i64: 64, 1>}, {pipeline_mode = #tpu.pipeline_mode<synchronous>, transform_indices = @transform_5, window_bounds = array<i64: 4, 64>}, {pipeline_mode = #tpu.pipeline_mode<synchronous>, transform_indices = @transform_6, window_bounds = array<i64: 4, 1>}, {transform_indices = @transform_7, window_bounds = array<i64: 4, 2>}]} {
    %c0 = arith.constant 0 : index
    %c0_0 = arith.constant 0 : index
    %0 = vector.load %arg1[%c0, %c0_0] : memref<2x8xf32, #tpu.memory_space<vmem>>, vector<2x8xf32>
    %c0_1 = arith.constant 0 : index
    %c0_2 = arith.constant 0 : index
    %1 = vector.load %arg2[%c0_1, %c0_2] : memref<64x8xf32, #tpu.memory_space<vmem>>, vector<64x8xf32>
    %cst = arith.constant dense<0.000000e+00> : vector<64x2xf32>
    %2 = tpu.matmul %1, %0, %cst {dimension_numbers = #tpu.dot_dimension_numbers<[1], [1], [0], [0], [0, 0, 1, 0], [], []>} : vector<64x8xf32>, vector<2x8xf32>, vector<64x2xf32> -> vector<64x2xf32>
    %c0_3 = arith.constant 0 : index
    %c0_4 = arith.constant 0 : index
    %3 = vector.load %arg3[%c0_3, %c0_4] : memref<64x1xf32, #tpu.memory_space<vmem>>, vector<64x1xf32>
    %4 = vector.broadcast %3 : vector<64x1xf32> to vector<64x2xf32>
    %5 = arith.addf %2, %4 : vector<64x2xf32>
    %cst_5 = arith.constant 0.000000e+00 : f32
    %6 = vector.broadcast %cst_5 : f32 to vector<64x2xf32>
    %7 = arith.maximumf %5, %6 : vector<64x2xf32>
    %c0_6 = arith.constant 0 : index
    %c0_7 = arith.constant 0 : index
    %8 = vector.load %arg4[%c0_6, %c0_7] : memref<64x64xf32, #tpu.memory_space<vmem>>, vector<64x64xf32>
    %cst_8 = arith.constant dense<0.000000e+00> : vector<64x2xf32>
    %9 = tpu.matmul %8, %7, %cst_8 {dimension_numbers = #tpu.dot_dimension_numbers<[1], [0], [0], [1], [0, 0, 1, 1], [], []>} : vector<64x64xf32>, vector<64x2xf32>, vector<64x2xf32> -> vector<64x2xf32>
    %c0_9 = arith.constant 0 : index
    %c0_10 = arith.constant 0 : index
    %10 = vector.load %arg5[%c0_9, %c0_10] : memref<64x1xf32, #tpu.memory_space<vmem>>, vector<64x1xf32>
    %11 = vector.broadcast %10 : vector<64x1xf32> to vector<64x2xf32>
    %12 = arith.addf %9, %11 : vector<64x2xf32>
    %cst_11 = arith.constant 0.000000e+00 : f32
    %13 = vector.broadcast %cst_11 : f32 to vector<64x2xf32>
    %14 = arith.maximumf %12, %13 : vector<64x2xf32>
    %c0_12 = arith.constant 0 : index
    %c0_13 = arith.constant 0 : index
    %15 = vector.load %arg6[%c0_12, %c0_13] : memref<4x64xf32, #tpu.memory_space<vmem>>, vector<4x64xf32>
    %cst_14 = arith.constant dense<0.000000e+00> : vector<4x2xf32>
    %16 = tpu.matmul %15, %14, %cst_14 {dimension_numbers = #tpu.dot_dimension_numbers<[1], [0], [0], [1], [0, 0, 1, 1], [], []>} : vector<4x64xf32>, vector<64x2xf32>, vector<4x2xf32> -> vector<4x2xf32>
    %c0_15 = arith.constant 0 : index
    %c0_16 = arith.constant 0 : index
    %17 = vector.load %arg7[%c0_15, %c0_16] : memref<4x1xf32, #tpu.memory_space<vmem>>, vector<4x1xf32>
    %18 = vector.broadcast %17 : vector<4x1xf32> to vector<4x2xf32>
    %19 = arith.addf %16, %18 : vector<4x2xf32>
    %c0_17 = arith.constant 0 : index
    %c0_18 = arith.constant 0 : index
    %20 = vector.load %arg8[%c0_17, %c0_18] : memref<4x2xf32, #tpu.memory_space<vmem>>, vector<4x2xf32>
    tpu.vector_store %arg8[%c0_17, %c0_18], %19 {strides = array<i32>} : memref<4x2xf32, #tpu.memory_space<vmem>>, vector<4x2xf32>,
    return
  }
  func.func @transform_0(%arg0: i32) -> (i32, i32) {
    %c0_i32 = arith.constant 0 : i32
    %c0_i32_0 = arith.constant 0 : i32
    return %arg0, %c0_i32 : i32, i32
  }
  func.func @transform_1(%arg0: i32) -> (i32, i32) {
    %c0_i32 = arith.constant 0 : i32
    %c0_i32_0 = arith.constant 0 : i32
    %c0_i32_1 = arith.constant 0 : i32
    return %c0_i32, %c0_i32_0 : i32, i32
  }
  func.func @transform_2(%arg0: i32) -> (i32, i32) {
    %c0_i32 = arith.constant 0 : i32
    %c0_i32_0 = arith.constant 0 : i32
    %c0_i32_1 = arith.constant 0 : i32
    return %c0_i32, %c0_i32_0 : i32, i32
  }
  func.func @transform_3(%arg0: i32) -> (i32, i32) {
    %c0_i32 = arith.constant 0 : i32
    %c0_i32_0 = arith.constant 0 : i32
    %c0_i32_1 = arith.constant 0 : i32
    return %c0_i32, %c0_i32_0 : i32, i32
  }
  func.func @transform_4(%arg0: i32) -> (i32, i32) {
    %c0_i32 = arith.constant 0 : i32
    %c0_i32_0 = arith.constant 0 : i32
    %c0_i32_1 = arith.constant 0 : i32
    return %c0_i32, %c0_i32_0 : i32, i32
  }
  func.func @transform_5(%arg0: i32) -> (i32, i32) {
    %c0_i32 = arith.constant 0 : i32
    %c0_i32_0 = arith.constant 0 : i32
    %c0_i32_1 = arith.constant 0 : i32
    return %c0_i32, %c0_i32_0 : i32, i32
  }
  func.func @transform_6(%arg0: i32) -> (i32, i32) {
    %c0_i32 = arith.constant 0 : i32
    %c0_i32_0 = arith.constant 0 : i32
    %c0_i32_1 = arith.constant 0 : i32
    return %c0_i32, %c0_i32_0 : i32, i32
  }
  func.func @transform_7(%arg0: i32) -> (i32, i32) {
    %c0_i32 = arith.constant 0 : i32
    %c0_i32_0 = arith.constant 0 : i32
    return %c0_i32, %arg0 : i32, i32
  }
}

</mosaic_0001>

<llo_original>
// kernel: tpu_custom_call.1
$region0: #{tpu_custom_call.1}
  #allocation0 [shape = 'u32[]', space=smem, size = 0x4, offset = 0x4, fixed_abs, tag = 'smem constant byte address 0x4 - core index']
  #allocation1 [shape = 'u32[144,128]{1,0:T(1,128)}', space=vmem, size = 0x12000, scoped, tag = 'internal scratch']
  %s0 = inlined_call_operand.vmem [shape: f32[2,8], index: 0, kind: input, shape index: {}]
  %s1 = inlined_call_operand.vmem [shape: f32[64,8], index: 1, kind: input, shape index: {}]
  %s2 = inlined_call_operand.vmem [shape: f32[64,1], index: 2, kind: input, shape index: {}]
  %s3 = inlined_call_operand.vmem [shape: f32[64,64], index: 3, kind: input, shape index: {}]
  %s4 = inlined_call_operand.vmem [shape: f32[64,1], index: 4, kind: input, shape index: {}]
  %s5 = inlined_call_operand.vmem [shape: f32[4,64], index: 5, kind: input, shape index: {}]
  %s6 = inlined_call_operand.vmem [shape: f32[4,1], index: 6, kind: input, shape index: {}]
  %s7 = inlined_call_operand.vmem [shape: f32[4,2], index: 7, kind: output, shape index: {}]
  %s8 = sld [smem:[#allocation0]]
  $region38: #{tpu_custom_call.1} parent=0
    _
  %s10 = ssub.s32 1, %s8
  %s11 = scalar_select 0, %s10, %s8
  // Predicated region
  $region2: #{tpu_custom_call.1} parent=0 // pred_check
    _
  $region3: #{tpu_custom_call.1} parent=0 // pred_check_branch
    %13 = sbr.rel (0) target = $region5
  $region4: #{tpu_custom_call.1} parent=0 // pred_region
    _
  $region5: #{tpu_custom_call.1} parent=0 // pred_fallthru
    _
  // Predicated region
  $region6: #{tpu_custom_call.1} parent=0 // pred_check
    _
  $region7: #{tpu_custom_call.1} parent=0 // pred_check_branch
    %15 = sbr.rel (0) target = $region9
  $region8: #{tpu_custom_call.1} parent=0 // pred_region
    _
  $region9: #{tpu_custom_call.1} parent=0 // pred_fallthru
    _
  // Predicated region
  $region10: #{tpu_custom_call.1} parent=0 // pred_check
    _
  $region11: #{tpu_custom_call.1} parent=0 // pred_check_branch
    %17 = sbr.rel (0) target = $region13
  $region12: #{tpu_custom_call.1} parent=0 // pred_region
    _
  $region13: #{tpu_custom_call.1} parent=0 // pred_fallthru
    _
  // Predicated region
  $region14: #{tpu_custom_call.1} parent=0 // pred_check
    _
  $region15: #{tpu_custom_call.1} parent=0 // pred_check_branch
    %19 = sbr.rel (0) target = $region17
  $region16: #{tpu_custom_call.1} parent=0 // pred_region
    _
  $region17: #{tpu_custom_call.1} parent=0 // pred_fallthru
    _
  // Predicated region
  $region18: #{tpu_custom_call.1} parent=0 // pred_check
    _
  $region19: #{tpu_custom_call.1} parent=0 // pred_check_branch
    %21 = sbr.rel (0) target = $region21
  $region20: #{tpu_custom_call.1} parent=0 // pred_region
    _
  $region21: #{tpu_custom_call.1} parent=0 // pred_fallthru
    _
  // Predicated region
  $region22: #{tpu_custom_call.1} parent=0 // pred_check
    _
  $region23: #{tpu_custom_call.1} parent=0 // pred_check_branch
    %23 = sbr.rel (0) target = $region25
  $region24: #{tpu_custom_call.1} parent=0 // pred_region
    _
  $region25: #{tpu_custom_call.1} parent=0 // pred_fallthru
    _
  // Predicated region
  $region26: #{tpu_custom_call.1} parent=0 // pred_check
    _
  $region27: #{tpu_custom_call.1} parent=0 // pred_check_branch
    %25 = sbr.rel (0) target = $region29
  $region28: #{tpu_custom_call.1} parent=0 // pred_region
    _
  $region29: #{tpu_custom_call.1} parent=0 // pred_fallthru
    _
  %v26 = vld [vmem:[%s0] sm:$0x3]
  %v27 = vld [vmem:[%s1] sm:$0xff]
  %v28 = vld [vmem:[%s1 + $0x8] sm:$0xff]
  %v29 = vld [vmem:[%s1 + $0x10] sm:$0xff]
  %v30 = vld [vmem:[%s1 + $0x18] sm:$0xff]
  %v31 = vld [vmem:[%s1 + $0x20] sm:$0xff]
  %v32 = vld [vmem:[%s1 + $0x28] sm:$0xff]
  %v33 = vld [vmem:[%s1 + $0x30] sm:$0xff]
  %v34 = vld [vmem:[%s1 + $0x38] sm:$0xff]
  %v35 = vld [vmem:[%s2] sm:$0xff]
  %v36 = vld [vmem:[%s2 + $0x8] sm:$0xff]
  %v37 = vld [vmem:[%s2 + $0x10] sm:$0xff]
  %v38 = vld [vmem:[%s2 + $0x18] sm:$0xff]
  %v39 = vld [vmem:[%s2 + $0x20] sm:$0xff]
  %v40 = vld [vmem:[%s2 + $0x28] sm:$0xff]
  %v41 = vld [vmem:[%s2 + $0x30] sm:$0xff]
  %v42 = vld [vmem:[%s2 + $0x38] sm:$0xff]
  %44 = vset.pattern.permute.xlu0 0
  %45 = vperm.xlu0 %44, %v35
  %v46 = vpop.permute.xlu0 %45
  %49 = vset.pattern.permute.xlu0 0
  %50 = vperm.xlu0 %49, %v36
  %v51 = vpop.permute.xlu0 %50
  %54 = vset.pattern.permute.xlu0 0
  %55 = vperm.xlu0 %54, %v37
  %v56 = vpop.permute.xlu0 %55
  %59 = vset.pattern.permute.xlu0 0
  %60 = vperm.xlu0 %59, %v38
  %v61 = vpop.permute.xlu0 %60
  %64 = vset.pattern.permute.xlu0 0
  %65 = vperm.xlu0 %64, %v39
  %v66 = vpop.permute.xlu0 %65
  %69 = vset.pattern.permute.xlu0 0
  %70 = vperm.xlu0 %69, %v40
  %v71 = vpop.permute.xlu0 %70
  %74 = vset.pattern.permute.xlu0 0
  %75 = vperm.xlu0 %74, %v41
  %v76 = vpop.permute.xlu0 %75
  %79 = vset.pattern.permute.xlu0 0
  %80 = vperm.xlu0 %79, %v42
  %v81 = vpop.permute.xlu0 %80
  %vm83 = vcmask 64512
  %v85 = vsel %vm83, %v27, 0
  %v88 = vsel %vm83, %v28, 0
  %v91 = vsel %vm83, %v29, 0
  %v94 = vsel %vm83, %v30, 0
  %v97 = vsel %vm83, %v31, 0
  %v100 = vsel %vm83, %v32, 0
  %v103 = vsel %vm83, %v33, 0
  %v106 = vsel %vm83, %v34, 0
  %v109 = vsel %vm83, %v26, 0
  %111 = vmatprep.subr.mxu0 0.0
  %112 = vmatpush1.xpose.msra.mxu0 0.0
  %113 = vmatprep.subr.mxu0 0.0
  %114 = vmatpush1.xpose.msra.mxu0 0.0
  %115 = vmatprep.subr.mxu0 0.0
  %116 = vmatpush1.xpose.msra.mxu0 0.0
  %117 = vmatprep.subr.mxu0 0.0
  %118 = vmatpush1.xpose.msra.mxu0 0.0
  %119 = vmatprep.subr.mxu0 0.0
  %120 = vmatpush1.xpose.msra.mxu0 0.0
  %121 = vmatprep.subr.mxu0 0.0
  %122 = vmatpush1.xpose.msra.mxu0 0.0
  %123 = vmatprep.subr.mxu0 0.0
  %124 = vmatpush1.xpose.msra.mxu0 0.0
  %125 = vmatprep.subr.mxu0 0.0
  %126 = vmatpush1.xpose.msra.mxu0 0.0
  %127 = vmatprep.subr.mxu0 0.0
  %128 = vmatpush1.xpose.msra.mxu0 0.0
  %129 = vmatprep.subr.mxu0 0.0
  %130 = vmatpush1.xpose.msra.mxu0 0.0
  %131 = vmatprep.subr.mxu0 0.0
  %132 = vmatpush1.xpose.msra.mxu0 0.0
  %133 = vmatprep.subr.mxu0 0.0
  %134 = vmatpush1.xpose.msra.mxu0 0.0
  %135 = vmatprep.subr.mxu0 0.0
  %136 = vmatpush1.xpose.msra.mxu0 0.0
  %137 = vmatprep.subr.mxu0 0.0
  %138 = vmatpush1.xpose.msra.mxu0 0.0
  %139 = vmatprep.subr.mxu0 0.0
  %140 = vmatpush1.xpose.msra.mxu0 0.0
  %141 = vmatprep.subr.mxu0 0.0
  %142 = vmatpush1.xpose.msra.mxu0 %v109
  %143 = vmatprep.subr.mxu0 0.0
  %144 = vmatpush2.xpose.msra.mxu0 0.0
  %145 = vmatprep.subr.mxu0 0.0
  %146 = vmatpush2.xpose.msra.mxu0 0.0
  %147 = vmatprep.subr.mxu0 0.0
  %148 = vmatpush2.xpose.msra.mxu0 0.0
  %149 = vmatprep.subr.mxu0 0.0
  %150 = vmatpush2.xpose.msra.mxu0 0.0
  %151 = vmatprep.subr.mxu0 0.0
  %152 = vmatpush2.xpose.msra.mxu0 0.0
  %153 = vmatprep.subr.mxu0 0.0
  %154 = vmatpush2.xpose.msra.mxu0 0.0
  %155 = vmatprep.subr.mxu0 0.0
  %156 = vmatpush2.xpose.msra.mxu0 0.0
  %157 = vmatprep.subr.mxu0 0.0
  %158 = vmatpush2.xpose.msra.mxu0 0.0
  %159 = vmatprep.subr.mxu0 0.0
  %160 = vmatpush2.xpose.msra.mxu0 0.0
  %161 = vmatprep.subr.mxu0 0.0
  %162 = vmatpush2.xpose.msra.mxu0 0.0
  %163 = vmatprep.subr.mxu0 0.0
  %164 = vmatpush2.xpose.msra.mxu0 0.0
  %165 = vmatprep.subr.mxu0 0.0
  %166 = vmatpush2.xpose.msra.mxu0 0.0
  %167 = vmatprep.subr.mxu0 0.0
  %168 = vmatpush2.xpose.msra.mxu0 0.0
  %169 = vmatprep.subr.mxu0 0.0
  %170 = vmatpush2.xpose.msra.mxu0 0.0
  %171 = vmatprep.subr.mxu0 0.0
  %172 = vmatpush2.xpose.msra.mxu0 0.0
  %173 = vmatprep.subr.mxu0 0.0
  %174 = vmatpush2.xpose.msra.mxu0 0.0
  %175 = vmatprep.mubr.f32.mxu0 0.0
  %176 = vmatmul.mubr.f32.gmra.mxu0 %v85
  %v177 = vpop.f32.mrf.mxu0
  %v178 = vadd.f32 %v46, %v177
  %v179 = vpop.f32.mrf.mxu0
  %180 = vmatprep.mubr.f32.mxu0 0.0
  %181 = vmatmul.mubr.f32.gmra.mxu0 %v88
  %v182 = vpop.f32.mrf.mxu0
  %v183 = vadd.f32 %v51, %v182
  %v184 = vpop.f32.mrf.mxu0
  %185 = vmatprep.mubr.f32.mxu0 0.0
  %186 = vmatmul.mubr.f32.gmra.mxu0 %v91
  %v187 = vpop.f32.mrf.mxu0
  %v188 = vadd.f32 %v56, %v187
  %v189 = vpop.f32.mrf.mxu0
  %190 = vmatprep.mubr.f32.mxu0 0.0
  %191 = vmatmul.mubr.f32.gmra.mxu0 %v94
  %v192 = vpop.f32.mrf.mxu0
  %v193 = vadd.f32 %v61, %v192
  %v194 = vpop.f32.mrf.mxu0
  %195 = vmatprep.mubr.f32.mxu0 0.0
  %196 = vmatmul.mubr.f32.gmra.mxu0 %v97
  %v197 = vpop.f32.mrf.mxu0
  %v198 = vadd.f32 %v66, %v197
  %v199 = vpop.f32.mrf.mxu0
  %200 = vmatprep.mubr.f32.mxu0 0.0
  %201 = vmatmul.mubr.f32.gmra.mxu0 %v100
  %v202 = vpop.f32.mrf.mxu0
  %v203 = vadd.f32 %v71, %v202
  %v204 = vpop.f32.mrf.mxu0
  %205 = vmatprep.mubr.f32.mxu0 0.0
  %206 = vmatmul.mubr.f32.gmra.mxu0 %v103
  %v207 = vpop.f32.mrf.mxu0
  %v208 = vadd.f32 %v76, %v207
  %v209 = vpop.f32.mrf.mxu0
  %210 = vmatprep.mubr.f32.mxu0 0.0
  %211 = vmatmul.mubr.f32.gmra.mxu0 %v106
  %v212 = vpop.f32.mrf.mxu0
  %v213 = vadd.f32 %v81, %v212
  %v214 = vpop.f32.mrf.mxu0
  %215 = vdwg.mxu0
  %v216 = vmax.f32 %v178, 0.0
  %v217 = vmax.f32 %v183, 0.0
  %v218 = vmax.f32 %v188, 0.0
  %v219 = vmax.f32 %v193, 0.0
  %v220 = vmax.f32 %v198, 0.0
  %v221 = vmax.f32 %v203, 0.0
  %v222 = vmax.f32 %v208, 0.0
  %v223 = vmax.f32 %v213, 0.0
  %v224 = vld [vmem:[%s3] sm:$0xff]
  %v225 = vld [vmem:[%s3 + $0x8] sm:$0xff]
  %v226 = vld [vmem:[%s3 + $0x10] sm:$0xff]
  %v227 = vld [vmem:[%s3 + $0x18] sm:$0xff]
  %v228 = vld [vmem:[%s3 + $0x20] sm:$0xff]
  %v229 = vld [vmem:[%s3 + $0x28] sm:$0xff]
  %v230 = vld [vmem:[%s3 + $0x30] sm:$0xff]
  %v231 = vld [vmem:[%s3 + $0x38] sm:$0xff]
  %v232 = vld [vmem:[%s4] sm:$0xff]
  %v233 = vld [vmem:[%s4 + $0x8] sm:$0xff]
  %v234 = vld [vmem:[%s4 + $0x10] sm:$0xff]
  %v235 = vld [vmem:[%s4 + $0x18] sm:$0xff]
  %v236 = vld [vmem:[%s4 + $0x20] sm:$0xff]
  %v237 = vld [vmem:[%s4 + $0x28] sm:$0xff]
  %v238 = vld [vmem:[%s4 + $0x30] sm:$0xff]
  %v239 = vld [vmem:[%s4 + $0x38] sm:$0xff]
  %241 = vset.pattern.permute.xlu0 0
  %242 = vperm.xlu0 %241, %v232
  %v243 = vpop.permute.xlu0 %242
  %246 = vset.pattern.permute.xlu0 0
  %247 = vperm.xlu0 %246, %v233
  %v248 = vpop.permute.xlu0 %247
  %251 = vset.pattern.permute.xlu0 0
  %252 = vperm.xlu0 %251, %v234
  %v253 = vpop.permute.xlu0 %252
  %256 = vset.pattern.permute.xlu0 0
  %257 = vperm.xlu0 %256, %v235
  %v258 = vpop.permute.xlu0 %257
  %261 = vset.pattern.permute.xlu0 0
  %262 = vperm.xlu0 %261, %v236
  %v263 = vpop.permute.xlu0 %262
  %266 = vset.pattern.permute.xlu0 0
  %267 = vperm.xlu0 %266, %v237
  %v268 = vpop.permute.xlu0 %267
  %271 = vset.pattern.permute.xlu0 0
  %272 = vperm.xlu0 %271, %v238
  %v273 = vpop.permute.xlu0 %272
  %276 = vset.pattern.permute.xlu0 0
  %277 = vperm.xlu0 %276, %v239
  %v278 = vpop.permute.xlu0 %277
  %vm280 = vcmask 523264
  %v282 = vsel %vm280, %v224, 0
  %v285 = vsel %vm280, %v225, 0
  %v288 = vsel %vm280, %v226, 0
  %v291 = vsel %vm280, %v227, 0
  %v294 = vsel %vm280, %v228, 0
  %v297 = vsel %vm280, %v229, 0
  %v300 = vsel %vm280, %v230, 0
  %v303 = vsel %vm280, %v231, 0
  %305 = vmatprep.subr.mxu0 0.0
  %306 = vmatpush1.msra.mxu0 0.0
  %307 = vmatprep.subr.mxu0 0.0
  %308 = vmatpush1.msra.mxu0 0.0
  %309 = vmatprep.subr.mxu0 0.0
  %310 = vmatpush1.msra.mxu0 0.0
  %311 = vmatprep.subr.mxu0 0.0
  %312 = vmatpush1.msra.mxu0 0.0
  %313 = vmatprep.subr.mxu0 0.0
  %314 = vmatpush1.msra.mxu0 0.0
  %315 = vmatprep.subr.mxu0 0.0
  %316 = vmatpush1.msra.mxu0 0.0
  %317 = vmatprep.subr.mxu0 0.0
  %318 = vmatpush1.msra.mxu0 0.0
  %319 = vmatprep.subr.mxu0 0.0
  %320 = vmatpush1.msra.mxu0 0.0
  %321 = vmatprep.subr.mxu0 0.0
  %322 = vmatpush1.msra.mxu0 %v223
  %323 = vmatprep.subr.mxu0 0.0
  %324 = vmatpush1.msra.mxu0 %v222
  %325 = vmatprep.subr.mxu0 0.0
  %326 = vmatpush1.msra.mxu0 %v221
  %327 = vmatprep.subr.mxu0 0.0
  %328 = vmatpush1.msra.mxu0 %v220
  %329 = vmatprep.subr.mxu0 0.0
  %330 = vmatpush1.msra.mxu0 %v219
  %331 = vmatprep.subr.mxu0 0.0
  %332 = vmatpush1.msra.mxu0 %v218
  %333 = vmatprep.subr.mxu0 0.0
  %334 = vmatpush1.msra.mxu0 %v217
  %335 = vmatprep.subr.mxu0 0.0
  %336 = vmatpush1.msra.mxu0 %v216
  %337 = vmatprep.subr.mxu0 0.0
  %338 = vmatpush2.msra.mxu0 0.0
  %339 = vmatprep.subr.mxu0 0.0
  %340 = vmatpush2.msra.mxu0 0.0
  %341 = vmatprep.subr.mxu0 0.0
  %342 = vmatpush2.msra.mxu0 0.0
  %343 = vmatprep.subr.mxu0 0.0
  %344 = vmatpush2.msra.mxu0 0.0
  %345 = vmatprep.subr.mxu0 0.0
  %346 = vmatpush2.msra.mxu0 0.0
  %347 = vmatprep.subr.mxu0 0.0
  %348 = vmatpush2.msra.mxu0 0.0
  %349 = vmatprep.subr.mxu0 0.0
  %350 = vmatpush2.msra.mxu0 0.0
  %351 = vmatprep.subr.mxu0 0.0
  %352 = vmatpush2.msra.mxu0 0.0
  %353 = vmatprep.subr.mxu0 0.0
  %354 = vmatpush2.msra.mxu0 0.0
  %355 = vmatprep.subr.mxu0 0.0
  %356 = vmatpush2.msra.mxu0 0.0
  %357 = vmatprep.subr.mxu0 0.0
  %358 = vmatpush2.msra.mxu0 0.0
  %359 = vmatprep.subr.mxu0 0.0
  %360 = vmatpush2.msra.mxu0 0.0
  %361 = vmatprep.subr.mxu0 0.0
  %362 = vmatpush2.msra.mxu0 0.0
  %363 = vmatprep.subr.mxu0 0.0
  %364 = vmatpush2.msra.mxu0 0.0
  %365 = vmatprep.subr.mxu0 0.0
  %366 = vmatpush2.msra.mxu0 0.0
  %367 = vmatprep.subr.mxu0 0.0
  %368 = vmatpush2.msra.mxu0 0.0
  %369 = vmatprep.mubr.f32.mxu0 0.0
  %370 = vmatmul.mubr.f32.gmra.mxu0 %v282
  %v371 = vpop.f32.mrf.mxu0
  %v372 = vadd.f32 %v243, %v371
  %v373 = vpop.f32.mrf.mxu0
  %374 = vmatprep.mubr.f32.mxu0 0.0
  %375 = vmatmul.mubr.f32.gmra.mxu0 %v285
  %v376 = vpop.f32.mrf.mxu0
  %v377 = vadd.f32 %v248, %v376
  %v378 = vpop.f32.mrf.mxu0
  %379 = vmatprep.mubr.f32.mxu0 0.0
  %380 = vmatmul.mubr.f32.gmra.mxu0 %v288
  %v381 = vpop.f32.mrf.mxu0
  %v382 = vadd.f32 %v253, %v381
  %v383 = vpop.f32.mrf.mxu0
  %384 = vmatprep.mubr.f32.mxu0 0.0
  %385 = vmatmul.mubr.f32.gmra.mxu0 %v291
  %v386 = vpop.f32.mrf.mxu0
  %v387 = vadd.f32 %v258, %v386
  %v388 = vpop.f32.mrf.mxu0
  %389 = vmatprep.mubr.f32.mxu0 0.0
  %390 = vmatmul.mubr.f32.gmra.mxu0 %v294
  %v391 = vpop.f32.mrf.mxu0
  %v392 = vadd.f32 %v263, %v391
  %v393 = vpop.f32.mrf.mxu0
  %394 = vmatprep.mubr.f32.mxu0 0.0
  %395 = vmatmul.mubr.f32.gmra.mxu0 %v297
  %v396 = vpop.f32.mrf.mxu0
  %v397 = vadd.f32 %v268, %v396
  %v398 = vpop.f32.mrf.mxu0
  %399 = vmatprep.mubr.f32.mxu0 0.0
  %400 = vmatmul.mubr.f32.gmra.mxu0 %v300
  %v401 = vpop.f32.mrf.mxu0
  %v402 = vadd.f32 %v273, %v401
  %v403 = vpop.f32.mrf.mxu0
  %404 = vmatprep.mubr.f32.mxu0 0.0
  %405 = vmatmul.mubr.f32.gmra.mxu0 %v303
  %v406 = vpop.f32.mrf.mxu0
  %v407 = vadd.f32 %v278, %v406
  %v408 = vpop.f32.mrf.mxu0
  %409 = vdwg.mxu0
  %v410 = vmax.f32 %v372, 0.0
  %v411 = vmax.f32 %v377, 0.0
  %v412 = vmax.f32 %v382, 0.0
  %v413 = vmax.f32 %v387, 0.0
  %v414 = vmax.f32 %v392, 0.0
  %v415 = vmax.f32 %v397, 0.0
  %v416 = vmax.f32 %v402, 0.0
  %v417 = vmax.f32 %v407, 0.0
  %v418 = vld [vmem:[%s5] sm:$0xf]
  %v419 = vld [vmem:[%s6] sm:$0xf]
  %421 = vset.pattern.permute.xlu0 0
  %422 = vperm.xlu0 %421, %v419
  %v423 = vpop.permute.xlu0 %422
  %v426 = vsel %vm280, %v418, 0
  %428 = vmatprep.subr.mxu0 0.0
  %429 = vmatpush1.msra.mxu0 0.0
  %430 = vmatprep.subr.mxu0 0.0
  %431 = vmatpush1.msra.mxu0 0.0
  %432 = vmatprep.subr.mxu0 0.0
  %433 = vmatpush1.msra.mxu0 0.0
  %434 = vmatprep.subr.mxu0 0.0
  %435 = vmatpush1.msra.mxu0 0.0
  %436 = vmatprep.subr.mxu0 0.0
  %437 = vmatpush1.msra.mxu0 0.0
  %438 = vmatprep.subr.mxu0 0.0
  %439 = vmatpush1.msra.mxu0 0.0
  %440 = vmatprep.subr.mxu0 0.0
  %441 = vmatpush1.msra.mxu0 0.0
  %442 = vmatprep.subr.mxu0 0.0
  %443 = vmatpush1.msra.mxu0 0.0
  %444 = vmatprep.subr.mxu0 0.0
  %445 = vmatpush1.msra.mxu0 %v417
  %446 = vmatprep.subr.mxu0 0.0
  %447 = vmatpush1.msra.mxu0 %v416
  %448 = vmatprep.subr.mxu0 0.0
  %449 = vmatpush1.msra.mxu0 %v415
  %450 = vmatprep.subr.mxu0 0.0
  %451 = vmatpush1.msra.mxu0 %v414
  %452 = vmatprep.subr.mxu0 0.0
  %453 = vmatpush1.msra.mxu0 %v413
  %454 = vmatprep.subr.mxu0 0.0
  %455 = vmatpush1.msra.mxu0 %v412
  %456 = vmatprep.subr.mxu0 0.0
  %457 = vmatpush1.msra.mxu0 %v411
  %458 = vmatprep.subr.mxu0 0.0
  %459 = vmatpush1.msra.mxu0 %v410
  %460 = vmatprep.subr.mxu0 0.0
  %461 = vmatpush2.msra.mxu0 0.0
  %462 = vmatprep.subr.mxu0 0.0
  %463 = vmatpush2.msra.mxu0 0.0
  %464 = vmatprep.subr.mxu0 0.0
  %465 = vmatpush2.msra.mxu0 0.0
  %466 = vmatprep.subr.mxu0 0.0
  %467 = vmatpush2.msra.mxu0 0.0
  %468 = vmatprep.subr.mxu0 0.0
  %469 = vmatpush2.msra.mxu0 0.0
  %470 = vmatprep.subr.mxu0 0.0
  %471 = vmatpush2.msra.mxu0 0.0
  %472 = vmatprep.subr.mxu0 0.0
  %473 = vmatpush2.msra.mxu0 0.0
  %474 = vmatprep.subr.mxu0 0.0
  %475 = vmatpush2.msra.mxu0 0.0
  %476 = vmatprep.subr.mxu0 0.0
  %477 = vmatpush2.msra.mxu0 0.0
  %478 = vmatprep.subr.mxu0 0.0
  %479 = vmatpush2.msra.mxu0 0.0
  %480 = vmatprep.subr.mxu0 0.0
  %481 = vmatpush2.msra.mxu0 0.0
  %482 = vmatprep.subr.mxu0 0.0
  %483 = vmatpush2.msra.mxu0 0.0
  %484 = vmatprep.subr.mxu0 0.0
  %485 = vmatpush2.msra.mxu0 0.0
  %486 = vmatprep.subr.mxu0 0.0
  %487 = vmatpush2.msra.mxu0 0.0
  %488 = vmatprep.subr.mxu0 0.0
  %489 = vmatpush2.msra.mxu0 0.0
  %490 = vmatprep.subr.mxu0 0.0
  %491 = vmatpush2.msra.mxu0 0.0
  %492 = vmatprep.mubr.f32.mxu0 0.0
  %493 = vmatmul.mubr.f32.gmra.mxu0 %v426
  %v494 = vpop.f32.mrf.mxu0
  %v495 = vadd.f32 %v423, %v494
  %v496 = vpop.f32.mrf.mxu0
  %497 = vdwg.mxu0
  %vm498 = vcmask 11264
  %499 = vst.msk [vmem:[%s7] sm:$0xf] %vm498, %v495
  // Predicated region
  $region30: #{tpu_custom_call.1} parent=0 // pred_check
    _
  $region31: #{tpu_custom_call.1} parent=0 // pred_check_branch
    %501 = sbr.rel (0) target = $region33
  $region32: #{tpu_custom_call.1} parent=0 // pred_region
    _
  $region33: #{tpu_custom_call.1} parent=0 // pred_fallthru
    _
  // Predicated region
  $region34: #{tpu_custom_call.1} parent=0 // pred_check
    _
  $region35: #{tpu_custom_call.1} parent=0 // pred_check_branch
    %503 = sbr.rel (0) target = $region37
  $region36: #{tpu_custom_call.1} parent=0 // pred_region
    _
  $region37: #{tpu_custom_call.1} parent=0 // pred_fallthru
    _

</llo_original>
